<compile_context>
chip_gen: v7x
topology: tpu7x:2x2x1
jax: 0.10.0
libtpu: 0.0.40
codegen_flags: <defaults>
</compile_context>

<pallas_src>
import functools

import jax
import jax.numpy as jnp
from jax.experimental import pallas as pl
from jax.experimental.pallas import tpu as pltpu

_EPS = 1e-12
_LANE = 128


def _round_up(x, m):
    return ((x + m - 1) // m) * m


# --------------------------------------------------------------------------------------
# Kernels
# --------------------------------------------------------------------------------------

def _kl_kernel(pred_ref, tgt_ref, out_ref):
    # binary=False path: loss_i = sum_c KL( log(sigmoid(pred)+eps) || target )
    # Padded class lanes have target == 0 and therefore contribute exactly 0
    # (PyTorch F.kl_div defines the pointwise term as 0 where target <= 0).
    x = pred_ref[...].astype(jnp.float32)
    t = tgt_ref[...].astype(jnp.float32)
    log_p = jnp.log(jax.nn.sigmoid(x) + _EPS)
    safe_t = jnp.where(t > 0, t, 1.0)
    elem = jnp.where(t > 0, t * (jnp.log(safe_t) - log_p), 0.0)
    out_ref[...] = jnp.sum(elem, axis=-1, keepdims=True)


def _jsd_kernel(pred_ref, tgt_ref, out_ref, *, num_class):
    # binary=True path (Jensen-Shannon style):
    #   p = (sigmoid(x), 1-sigmoid(x)),  t = (t, 1-t),  m = 0.5*(p + t)
    #   loss_i = 0.5 * sum_c sum_s m_s * (2*log m_s - log(p_s+eps) - log(t_s+eps))
    # Each log is computed exactly once (EUP is the binding unit on this path).
    x = pred_ref[...].astype(jnp.float32)
    t1 = tgt_ref[...].astype(jnp.float32)
    p1 = jax.nn.sigmoid(x)
    p2 = 1.0 - p1
    t2 = 1.0 - t1
    m1 = 0.5 * (p1 + t1)
    m2 = 0.5 * (p2 + t2)

    lp1 = jnp.log(p1 + _EPS)
    lp2 = jnp.log(p2 + _EPS)
    lt1 = jnp.log(t1 + _EPS)
    lt2 = jnp.log(t2 + _EPS)

    def _term(m, lp, lt):
        # m can only be exactly 0 when sigmoid saturates in f32 AND target is
        # exactly 0/1; PyTorch kl_div defines those terms as 0, so keep a cheap
        # VPU guard (compare + 2 selects) instead of risking 0 * (-inf) = nan.
        lm = jnp.log(jnp.where(m > 0, m, 1.0))
        return jnp.where(m > 0, m * (2.0 * lm - lp - lt), 0.0)

    loss = 0.5 * (_term(m1, lp1, lt1) + _term(m2, lp2, lt2))

    # Zero out padded class lanes (they would otherwise contribute a nonzero term).
    lane = jax.lax.broadcasted_iota(jnp.int32, loss.shape, dimension=1)
    loss = jnp.where(lane < num_class, loss, 0.0)

    out_ref[...] = jnp.sum(loss, axis=-1, keepdims=True)


# --------------------------------------------------------------------------------------
# Wrapper
# --------------------------------------------------------------------------------------

def _choose_block_rows(n, c_pad, itemsize, sublane):
    # Budget the double-buffered input blocks (2 inputs x 2 pipeline buffers) at
    # ~8 MiB: far past the measured ~85%-of-HBM-roofline tile-size knee, yet well
    # inside every generation's scoped VMEM default (v5e 16 MiB, v6e/v7x 32 MiB);
    # output blocks are negligible (block_rows x 4 B).
    budget_bytes = 8 * 1024 * 1024
    rows = budget_bytes // (2 * 2 * c_pad * itemsize)
    rows = max(sublane, (rows // sublane) * sublane)
    # Keep at least 2 grid steps whenever the row count allows it, so the
    # "parallel" row axis can shard across both TensorCores on v7x megacore.
    half = _round_up(max(1, (n + 1) // 2), sublane)
    rows = min(rows, max(sublane, half))
    return rows


def _per_box_loss(pred, target, binary=False, block_rows=None):
    """Per-bbox loss [num_bbox] computed with a Pallas kernel (padded + tiled)."""
    n, c = pred.shape
    c_pad = _round_up(c, _LANE)
    itemsize = jnp.dtype(pred.dtype).itemsize
    sublane = max(8, 32 // itemsize)  # 8 for f32, 16 for bf16

    if block_rows is None:
        block_rows = _choose_block_rows(n, c_pad, itemsize, sublane)
    block_rows = _round_up(block_rows, sublane)

    num_blocks = (n + block_rows - 1) // block_rows
    n_pad = num_blocks * block_rows

    if n_pad != n or c_pad != c:
        # Zero-pad rows and class lanes; padded entries contribute 0 (see kernels)
        # and padded rows are sliced away below.
        pred = jnp.pad(pred, ((0, n_pad - n), (0, c_pad - c)))
        target = jnp.pad(target, ((0, n_pad - n), (0, c_pad - c)))

    kernel = functools.partial(_jsd_kernel, num_class=c) if binary else _kl_kernel

    out = pl.pallas_call(
        kernel,
        out_shape=jax.ShapeDtypeStruct((n_pad, 1), jnp.float32),
        grid_spec=pltpu.PrefetchScalarGridSpec(
            num_scalar_prefetch=0,
            grid=(num_blocks,),
            in_specs=[
                pl.BlockSpec((block_rows, c_pad), lambda i: (i, 0)),
                pl.BlockSpec((block_rows, c_pad), lambda i: (i, 0)),
            ],
            out_specs=pl.BlockSpec((block_rows, 1), lambda i: (i, 0)),
        ),
        compiler_params=pltpu.CompilerParams(dimension_semantics=("parallel",)),
    )(pred, target)

    return out[:n, 0]


# --------------------------------------------------------------------------------------
# Module port
# --------------------------------------------------------------------------------------

class BinaryKLDivLoss:
    """JAX/Pallas port of the PyTorch BinaryKLDivLoss module."""

    def __init__(self, reduction='mean', loss_weight=1.0, class_weight=None,
                 use_sigmoid=False, eps=1e-12):
        self.reduction = reduction
        self.loss_weight = loss_weight          # unused in the original forward
        self.class_weight = class_weight        # constructed but unused in the original forward
        self.use_sigmoid = use_sigmoid
        self.eps = eps

    def __call__(self, pred, target, weight=None, avg_factor=None,
                 reduction_override=None, binary=False):
        assert reduction_override in (None, 'none', 'mean', 'sum')
        reduction = reduction_override if reduction_override else self.reduction

        # hot path: per-bbox loss in Pallas
        loss = _per_box_loss(pred, target, binary=binary)

        # weight_reduce_loss (mmdet semantics). NOTE: the original module multiplies
        # the (n,) per-box loss by weight.reshape(-1, 1), which broadcasts to (n, n)
        # before the reduction; this is reproduced exactly here.
        if weight is not None:
            loss = loss * jnp.reshape(weight, (-1, 1))
        if avg_factor is None:
            if reduction == 'mean':
                loss = jnp.mean(loss)
            elif reduction == 'sum':
                loss = jnp.sum(loss)
        else:
            if reduction == 'mean':
                loss = jnp.sum(loss) / avg_factor
            elif reduction != 'none':
                raise ValueError('avg_factor can not be used with reduction="sum"')
        return loss


# --------------------------------------------------------------------------------------
# Pure-jnp reference (mirrors the PyTorch forward, per-box, pre-reduction)
# --------------------------------------------------------------------------------------

def _reference_per_box_loss(pred, target, binary=False):
    def kl(log_input, t):
        safe_t = jnp.where(t > 0, t, 1.0)
        return jnp.where(t > 0, t * (jnp.log(safe_t) - log_input), 0.0)

    if binary:
        p1 = jax.nn.sigmoid(pred)
        p2 = 1.0 - p1
        t1 = target
        t2 = 1.0 - t1
        pp = jnp.stack((p1, p2), axis=-1)
        tp = jnp.stack((t1, t2), axis=-1)
        m = 0.5 * (pp + tp)
        l1 = kl(jnp.log(pp + _EPS), m).sum(-1).sum(-1)
        l2 = kl(jnp.log(tp + _EPS), m).sum(-1).sum(-1)
        return 0.5 * (l1 + l2)
    else:
        p = jax.nn.sigmoid(pred)
        return kl(jnp.log(p + _EPS), target).sum(-1)


if __name__ == "__main__":
    key = jax.random.PRNGKey(0)
    loss_mod = BinaryKLDivLoss(reduction='mean')

    # Two shapes: the tiny aligned case and a DETR-like unaligned case
    # (exercises row/lane padding and the multi-step grid).
    for (num_bbox, num_class) in [(8, 32), (300, 81)]:
        k1, k2, k3, key = jax.random.split(key, 4)
        pred = jax.random.normal(k1, (num_bbox, num_class), dtype=jnp.float32)
        # targets are probabilities in [0, 1]
        target = jax.nn.sigmoid(jax.random.normal(k2, (num_bbox, num_class), dtype=jnp.float32))
        weight = jax.random.uniform(k3, (num_bbox,), dtype=jnp.float32)

        # binary=False (default) path
        out_kl = loss_mod(pred, target)
        # binary=True (Jensen-Shannon style) path
        out_jsd = loss_mod(pred, target, binary=True)
        # 'none' reduction, no weight
        out_none = loss_mod(pred, target, reduction_override='none')
        # weighted + avg_factor path (reproduces original broadcast semantics)
        out_w = loss_mod(pred, target, weight=weight, avg_factor=4.0)

        jax.block_until_ready((out_kl, out_jsd, out_none, out_w))

        # correctness check vs pure-jnp reference
        ref_pb_kl = _reference_per_box_loss(pred, target, binary=False)
        ref_pb_jsd = _reference_per_box_loss(pred, target, binary=True)
        ref_kl = jnp.mean(ref_pb_kl)
        ref_jsd = jnp.mean(ref_pb_jsd)
        ref_w = jnp.sum(ref_pb_kl * jnp.reshape(weight, (-1, 1))) / 4.0

        assert jnp.allclose(out_kl, ref_kl, rtol=2e-5, atol=2e-5)
        assert jnp.allclose(out_jsd, ref_jsd, rtol=2e-5, atol=2e-5)
        assert jnp.allclose(out_none, ref_pb_kl, rtol=2e-5, atol=2e-5)
        assert jnp.allclose(out_w, ref_w, rtol=2e-5, atol=2e-5)

    print("KERNEL_OK")
</pallas_src>

<mosaic_0001>
module attributes {stable_mosaic.version = 11 : i64} {
  func.func @_kl_kernel(%arg0: i32, %arg1: memref<8x128xf32, #tpu.memory_space<vmem>>, %arg2: memref<8x128xf32, #tpu.memory_space<vmem>>, %arg3: memref<8x1xf32, #tpu.memory_space<vmem>>) attributes {dimension_semantics = [#tpu.dimension_semantics<parallel>], iteration_bounds = array<i64: 1>, scalar_prefetch = 0 : i64, scratch_operands = 0 : i64, tpu.core_type = #tpu.core_type<tc>, window_params = [{transform_indices = @transform_0, window_bounds = array<i64: 8, 128>}, {transform_indices = @transform_1, window_bounds = array<i64: 8, 128>}, {transform_indices = @transform_2, window_bounds = array<i64: 8, 1>}]} {
    %c0 = arith.constant 0 : index
    %c0_0 = arith.constant 0 : index
    %0 = vector.load %arg1[%c0, %c0_0] : memref<8x128xf32, #tpu.memory_space<vmem>>, vector<8x128xf32>
    %c0_1 = arith.constant 0 : index
    %c0_2 = arith.constant 0 : index
    %1 = vector.load %arg2[%c0_1, %c0_2] : memref<8x128xf32, #tpu.memory_space<vmem>>, vector<8x128xf32>
    %2 = arith.negf %0 : vector<8x128xf32>
    %3 = math.exp %2 : vector<8x128xf32>
    %cst = arith.constant 1.000000e+00 : f32
    %4 = vector.broadcast %cst : f32 to vector<8x128xf32>
    %5 = arith.addf %4, %3 : vector<8x128xf32>
    %6 = arith.divf %4, %5 : vector<8x128xf32>
    %cst_3 = arith.constant 9.99999996E-13 : f32
    %7 = vector.broadcast %cst_3 : f32 to vector<8x128xf32>
    %8 = arith.addf %6, %7 : vector<8x128xf32>
    %9 = math.log %8 : vector<8x128xf32>
    %cst_4 = arith.constant 0.000000e+00 : f32
    %10 = vector.broadcast %cst_4 : f32 to vector<8x128xf32>
    %11 = arith.cmpf ogt, %1, %10 : vector<8x128xf32>
    %cst_5 = arith.constant 1.000000e+00 : f32
    %12 = vector.broadcast %cst_5 : f32 to vector<8x128xf32>
    %13 = arith.select %11, %1, %12 : vector<8x128xi1>, vector<8x128xf32>
    %cst_6 = arith.constant 0.000000e+00 : f32
    %14 = vector.broadcast %cst_6 : f32 to vector<8x128xf32>
    %15 = arith.cmpf ogt, %1, %14 : vector<8x128xf32>
    %16 = math.log %13 : vector<8x128xf32>
    %17 = arith.subf %16, %9 : vector<8x128xf32>
    %18 = arith.mulf %1, %17 : vector<8x128xf32>
    %cst_7 = arith.constant 0.000000e+00 : f32
    %19 = vector.broadcast %cst_7 : f32 to vector<8x128xf32>
    %20 = arith.select %15, %18, %19 : vector<8x128xi1>, vector<8x128xf32>
    %cst_8 = arith.constant dense<0.000000e+00> : vector<8xf32>
    %21 = vector.multi_reduction <add>, %20, %cst_8 [1] : vector<8x128xf32> to vector<8xf32>
    %22 = vector.shape_cast %21 : vector<8xf32> to vector<8x1xf32>
    %c0_9 = arith.constant 0 : index
    %c0_10 = arith.constant 0 : index
    %23 = vector.load %arg3[%c0_9, %c0_10] : memref<8x1xf32, #tpu.memory_space<vmem>>, vector<8x1xf32>
    tpu.vector_store %arg3[%c0_9, %c0_10], %22 {strides = array<i32>} : memref<8x1xf32, #tpu.memory_space<vmem>>, vector<8x1xf32>,
    return
  }
  func.func @transform_0(%arg0: i32) -> (i32, i32) {
    %c0_i32 = arith.constant 0 : i32
    %c0_i32_0 = arith.constant 0 : i32
    return %arg0, %c0_i32 : i32, i32
  }
  func.func @transform_1(%arg0: i32) -> (i32, i32) {
    %c0_i32 = arith.constant 0 : i32
    %c0_i32_0 = arith.constant 0 : i32
    return %arg0, %c0_i32 : i32, i32
  }
  func.func @transform_2(%arg0: i32) -> (i32, i32) {
    %c0_i32 = arith.constant 0 : i32
    %c0_i32_0 = arith.constant 0 : i32
    return %arg0, %c0_i32 : i32, i32
  }
}

</mosaic_0001>

<llo_original>
// kernel: tpu_custom_call.1
$region0: #{tpu_custom_call.1}
  #allocation0 [shape = 'u32[]', space=smem, size = 0x4, offset = 0x4, fixed_abs, tag = 'smem constant byte address 0x4 - core index']
  #allocation1 [shape = 'u32[144,128]{1,0:T(1,128)}', space=vmem, size = 0x12000, scoped, tag = 'internal scratch']
  %s0 = inlined_call_operand.hbm [shape: f32[8,128], index: 0, kind: input, shape index: {}]
  %s1 = inlined_call_operand.hbm [shape: f32[8,128], index: 1, kind: input, shape index: {}]
  %s2 = inlined_call_operand.vmem [shape: f32[8,1], index: 2, kind: output, shape index: {}]
  %s3 = sld [smem:[#allocation0]]
  $region26: #{tpu_custom_call.1} parent=0
    _
  %s5 = ssub.s32 1, %s3
  %s6 = scalar_select 0, %s5, %s3
  $region1: #{tpu_custom_call.1} parent=0
    #allocation2 [shape = 'u8[4096]{0}', space=vmem, size = 0x1000, scoped, tag = 'input window, operand 0, single buffered']
    #allocation3 [shape = 's32[1]{0}', space=sflag, size = 0x4, scoped, tag = 'scoped memory for tpu_custom_call.1']
    #allocation4 [shape = 'u8[4096]{0}', space=vmem, size = 0x1000, scoped, tag = 'input window, operand 1, single buffered']
    #allocation5 [shape = 's32[1]{0}', space=sflag, size = 0x4, scoped, tag = 'scoped memory for tpu_custom_call.1']
    %7 = vsyncpa [#allocation3], 0
    %8 = vsyncpa [#allocation5], 0
    // Predicated region
    $region2: #{tpu_custom_call.1} parent=1 // pred_check
      _
    $region3: #{tpu_custom_call.1} parent=1 // pred_check_branch
      %10 = sbr.rel (0) target = $region5
    $region4: #{tpu_custom_call.1} parent=1 // pred_region
      %s12 = ssub.s32 128, 128
      %13 = vsyncadd [#allocation3], %s12
      %s15 = sshll.u32 [#allocation2], 4
      %s16 = int_to_ptr.vmem [resolvable:$true] %s15
      %18 = dma.hbm_to_vmem [thread:$0]  %s0, 128, %s16, [#allocation3]
    $region5: #{tpu_custom_call.1} parent=1 // pred_fallthru
      _
    // Predicated region
    $region6: #{tpu_custom_call.1} parent=1 // pred_check
      _
    $region7: #{tpu_custom_call.1} parent=1 // pred_check_branch
      %20 = sbr.rel (0) target = $region9
    $region8: #{tpu_custom_call.1} parent=1 // pred_region
      %s22 = ssub.s32 128, 128
      %23 = vsyncadd [#allocation5], %s22
      %s25 = sshll.u32 [#allocation4], 4
      %s26 = int_to_ptr.vmem [resolvable:$true] %s25
      %28 = dma.hbm_to_vmem [thread:$0]  %s1, 128, %s26, [#allocation5]
    $region9: #{tpu_custom_call.1} parent=1 // pred_fallthru
      _
    // Predicated region
    $region10: #{tpu_custom_call.1} parent=1 // pred_check
      _
    $region11: #{tpu_custom_call.1} parent=1 // pred_check_branch
      %30 = sbr.rel (0) target = $region13
    $region12: #{tpu_custom_call.1} parent=1 // pred_region
      %31 = dma.done [#allocation3], 128
    $region13: #{tpu_custom_call.1} parent=1 // pred_fallthru
      _
    // Predicated region
    $region14: #{tpu_custom_call.1} parent=1 // pred_check
      _
    $region15: #{tpu_custom_call.1} parent=1 // pred_check_branch
      %33 = sbr.rel (0) target = $region17
    $region16: #{tpu_custom_call.1} parent=1 // pred_region
      %34 = dma.done [#allocation5], 128
    $region17: #{tpu_custom_call.1} parent=1 // pred_fallthru
      _
    %v35 = vld [vmem:[#allocation2] sm:$0xff]
    %v36 = vld [vmem:[#allocation4] sm:$0xff]
    %v37 = vxor.u32 %v35, 2147483648
    %v38 = vmul.f32 %v37, 1.442695
    %v39 = vpow.pop %v38
    %v40 = vadd.f32 %v39, 1.0
    %v41 = vrcp.pop %v40
    %v42 = vmul.f32 1.0, %v41
    %v43 = vadd.f32 %v42, 1e-12
    %v44 = vlog2.pop %v43
    %v45 = vmul.f32 %v44, 0.6931472
    %vm46 = vcmp.gt.f32.partialorder %v36, 0.0
    %v47 = vsel %vm46, %v36, 1.0
    %v48 = vlog2.pop %v47
    %v49 = vmul.f32 %v48, 0.6931472
    %v50 = vsub.f32 %v49, %v45
    %v51 = vmul.f32 %v36, %v50
    %v52 = vsel %vm46, %v51, 0.0
    %53 = vadd.xlane.f32.xlu0 %v52
    %v54 = vpop.xlane.xlu0 %53
    %vm55 = vcmask 7168
    %56 = vst.msk [vmem:[%s2] sm:$0xff] %vm55, %v54
    // Predicated region
    $region18: #{tpu_custom_call.1} parent=1 // pred_check
      _
    $region19: #{tpu_custom_call.1} parent=1 // pred_check_branch
      %58 = sbr.rel (0) target = $region21
    $region20: #{tpu_custom_call.1} parent=1 // pred_region
      _
    $region21: #{tpu_custom_call.1} parent=1 // pred_fallthru
      _
    // Predicated region
    $region22: #{tpu_custom_call.1} parent=1 // pred_check
      _
    $region23: #{tpu_custom_call.1} parent=1 // pred_check_branch
      %60 = sbr.rel (0) target = $region25
    $region24: #{tpu_custom_call.1} parent=1 // pred_region
      _
    $region25: #{tpu_custom_call.1} parent=1 // pred_fallthru
      _
    %61 = vsyncpa [#allocation3], 1
    %62 = vsyncpa [#allocation5], 1

</llo_original>
